<compile_context>
chip_gen: v5e
topology: v5e:2x2
jax: 0.10.0
libtpu: 0.0.40
codegen_flags: <defaults>
</compile_context>

<pallas_src>
import functools

import jax
import jax.numpy as jnp
from jax.experimental import pallas as pl
from jax.experimental.pallas import tpu as pltpu


def _ntxent_kernel(zjs_ref, zis_ref, loss_ref, *, inv_temperature, use_cosine, eps):
    zj = zjs_ref[...].astype(jnp.float32)          # (1, D)
    zi = zis_ref[...].astype(jnp.float32)          # (1, D)

    # Positive similarity: sim[0, 1] == sim[1, 0] == <zj, zi> (symmetric).
    # VPU multiply + single XLU lane reduce; no MXU involvement.
    dot = jnp.sum(zj * zi)

    if use_cosine:
        # torch CosineSimilarity: x.y / max(||x|| * ||y||, eps).
        # Both rows share the same denominator, so compute it once.
        nj = jnp.sqrt(jnp.sum(zj * zj))
        ni = jnp.sqrt(jnp.sum(zi * zi))
        dot = dot / jnp.maximum(nj * ni, eps)

    # logits = positives * (1/temperature); inv_temperature baked at trace time.
    logit = dot * inv_temperature

    # batch_size == 1: no negatives survive the mask, so each cross-entropy row
    # is a single logit with label 0:
    #   loss_row = logsumexp([logit]) - logit
    # Both rows are identical by symmetry; final loss = 2 * loss_row / 2.
    loss_ref[0] = logit - logit


def ntxent_loss_valid(zis, zjs, temperature=0.5, use_cosine_similarity=True):
    """Pallas implementation of NTXentLoss_valid.forward (batch_size == 1)."""
    kernel = functools.partial(
        _ntxent_kernel,
        inv_temperature=float(1.0 / temperature),
        use_cosine=bool(use_cosine_similarity),
        eps=1e-8,
    )
    out = pl.pallas_call(
        kernel,
        out_shape=jax.ShapeDtypeStruct((1,), jnp.float32),
        in_specs=[
            pl.BlockSpec(memory_space=pltpu.MemorySpace.VMEM),
            pl.BlockSpec(memory_space=pltpu.MemorySpace.VMEM),
        ],
        out_specs=pl.BlockSpec(memory_space=pltpu.MemorySpace.SMEM),
    )(zjs, zis)
    return out[0]


def _reference(zis, zjs, temperature, use_cosine):
    # Pure-JAX reference of the PyTorch forward (batch_size == 1).
    reps = jnp.concatenate([zjs, zis], axis=0).astype(jnp.float32)
    if use_cosine:
        norms = jnp.sqrt(jnp.sum(reps * reps, axis=-1, keepdims=True))
        sim = (reps @ reps.T) / jnp.maximum(norms * norms.T, 1e-8)
    else:
        sim = reps @ reps.T
    positives = jnp.stack([sim[0, 1], sim[1, 0]])[:, None]           # (2, 1)
    logits = positives / temperature                                  # no negatives
    log_probs = logits - jax.scipy.special.logsumexp(logits, axis=-1, keepdims=True)
    loss = -jnp.sum(log_probs[:, 0])
    return loss / 2.0


if __name__ == "__main__":
    key = jax.random.PRNGKey(0)
    k1, k2 = jax.random.split(key)
    D = 32
    zis = jax.random.normal(k1, (1, D), dtype=jnp.float32)
    zjs = jax.random.normal(k2, (1, D), dtype=jnp.float32)

    temperature = 0.5

    # Cosine-similarity path (module default configuration).
    loss_cos = ntxent_loss_valid(zis, zjs, temperature, use_cosine_similarity=True)
    loss_cos = jax.block_until_ready(loss_cos)
    ref_cos = _reference(zis, zjs, temperature, use_cosine=True)
    assert jnp.allclose(loss_cos, ref_cos, atol=1e-5), (loss_cos, ref_cos)

    # Dot-product similarity path.
    loss_dot = ntxent_loss_valid(zis, zjs, temperature, use_cosine_similarity=False)
    loss_dot = jax.block_until_ready(loss_dot)
    ref_dot = _reference(zis, zjs, temperature, use_cosine=False)
    assert jnp.allclose(loss_dot, ref_dot, atol=1e-5), (loss_dot, ref_dot)

    print("KERNEL_OK")
</pallas_src>

<mosaic_0001>
module attributes {stable_mosaic.version = 11 : i64} {
  func.func @_ntxent_kernel(%arg0: memref<1x32xf32, #tpu.memory_space<vmem>>, %arg1: memref<1x32xf32, #tpu.memory_space<vmem>>, %arg2: memref<1xf32, #tpu.memory_space<smem>>) attributes {dimension_semantics = [], scalar_prefetch = 0 : i64, scratch_operands = 0 : i64, tpu.core_type = #tpu.core_type<tc>} {
    %c0 = arith.constant 0 : index
    %c0_0 = arith.constant 0 : index
    %0 = vector.load %arg0[%c0, %c0_0] : memref<1x32xf32, #tpu.memory_space<vmem>>, vector<1x32xf32>
    %c0_1 = arith.constant 0 : index
    %c0_2 = arith.constant 0 : index
    %1 = vector.load %arg1[%c0_1, %c0_2] : memref<1x32xf32, #tpu.memory_space<vmem>>, vector<1x32xf32>
    %2 = arith.mulf %0, %1 : vector<1x32xf32>
    %3 = vector.shape_cast %2 : vector<1x32xf32> to vector<1x1x32xf32>
    %cst = arith.constant dense<0.000000e+00> : vector<1xf32>
    %4 = vector.multi_reduction <add>, %3, %cst [1, 2] : vector<1x1x32xf32> to vector<1xf32>
    %5 = vector.shape_cast %4 : vector<1xf32> to vector<1x1x1xf32>
    %6 = vector.extract %5[0, 0, 0] : f32 from vector<1x1x1xf32>
    %7 = arith.mulf %0, %0 : vector<1x32xf32>
    %8 = vector.shape_cast %7 : vector<1x32xf32> to vector<1x1x32xf32>
    %cst_3 = arith.constant dense<0.000000e+00> : vector<1xf32>
    %9 = vector.multi_reduction <add>, %8, %cst_3 [1, 2] : vector<1x1x32xf32> to vector<1xf32>
    %10 = vector.shape_cast %9 : vector<1xf32> to vector<1x1x1xf32>
    %11 = vector.extract %10[0, 0, 0] : f32 from vector<1x1x1xf32>
    %12 = math.sqrt %11 : f32
    %13 = arith.mulf %1, %1 : vector<1x32xf32>
    %14 = vector.shape_cast %13 : vector<1x32xf32> to vector<1x1x32xf32>
    %cst_4 = arith.constant dense<0.000000e+00> : vector<1xf32>
    %15 = vector.multi_reduction <add>, %14, %cst_4 [1, 2] : vector<1x1x32xf32> to vector<1xf32>
    %16 = vector.shape_cast %15 : vector<1xf32> to vector<1x1x1xf32>
    %17 = vector.extract %16[0, 0, 0] : f32 from vector<1x1x1xf32>
    %18 = math.sqrt %17 : f32
    %19 = arith.mulf %12, %18 : f32
    %cst_5 = arith.constant 9.99999993E-9 : f32
    %20 = arith.maximumf %19, %cst_5 : f32
    %21 = arith.divf %6, %20 : f32
    %cst_6 = arith.constant 2.000000e+00 : f32
    %22 = arith.mulf %21, %cst_6 : f32
    %23 = arith.subf %22, %22 : f32
    %c0_7 = arith.constant 0 : index
    %24 = memref.load %arg2[%c0_7] : memref<1xf32, #tpu.memory_space<smem>>
    memref.store %23, %arg2[%c0_7] : memref<1xf32, #tpu.memory_space<smem>>
    return
  }
}

</mosaic_0001>

<llo_original>
// kernel: tpu_custom_call.1
$region0: #{tpu_custom_call.1}
  #allocation0 [shape = 'u32[]', space=smem, size = 0x4, offset = 0x4, fixed_abs, tag = 'smem constant byte address 0x4 - core index']
  #allocation1 [shape = 'u32[72,128]{1,0:T(1,128)}', space=vmem, size = 0x9000, scoped, tag = 'internal scratch']
  %s0 = inlined_call_operand.hbm [shape: f32[1,32], index: 0, kind: input, shape index: {}]
  %s1 = inlined_call_operand.hbm [shape: f32[1,32], index: 1, kind: input, shape index: {}]
  %s2 = inlined_call_operand.hbm [shape: f32[1], index: 2, kind: output, shape index: {}]
  %s3 = sld [smem:[#allocation0]]
  $region26: #{tpu_custom_call.1} parent=0
    _
  %s5 = ssub.s32 1, %s3
  %s6 = scalar_select 0, %s5, %s3
  $region1: #{tpu_custom_call.1} parent=0
    #allocation2 [shape = 'u8[512]{0}', space=vmem, size = 0x400, scoped, tag = 'input window, operand 0, single buffered']
    #allocation3 [shape = 's32[1]{0}', space=sflag, size = 0x4, scoped, tag = 'scoped memory for tpu_custom_call.1']
    #allocation4 [shape = 's32[1]{0}', space=sflag, size = 0x4, scoped, tag = 'scoped memory for tpu_custom_call.1']
    #allocation5 [shape = 'u8[512]{0}', space=vmem, size = 0x400, scoped, tag = 'input window, operand 1, single buffered']
    #allocation6 [shape = 's32[1]{0}', space=sflag, size = 0x4, scoped, tag = 'scoped memory for tpu_custom_call.1']
    #allocation7 [shape = 'u8[512]{0}', space=smem, size = 0x200, scoped, tag = 'output window, operand 0, single buffered']
    %7 = vsyncpa [#allocation3], 0
    %8 = vsyncpa [#allocation6], 0
    %9 = vsyncpa [#allocation4], 0
    // Predicated region
    $region2: #{tpu_custom_call.1} parent=1 // pred_check
      _
    $region3: #{tpu_custom_call.1} parent=1 // pred_check_branch
      %11 = sbr.rel (0) target = $region5
    $region4: #{tpu_custom_call.1} parent=1 // pred_region
      %13 = vsyncadd [#allocation3], 0
      %s15 = sshll.u32 %s0, 4
      %s16 = int_to_ptr.hbm [resolvable:$true] %s15
      %s17 = sshll.u32 [#allocation2], 4
      %s18 = int_to_ptr.vmem [resolvable:$true] %s17
      %20 = dma.hbm_to_vmem [thread:$0]  %s16, 16, %s18, [#allocation3]
    $region5: #{tpu_custom_call.1} parent=1 // pred_fallthru
      _
    // Predicated region
    $region6: #{tpu_custom_call.1} parent=1 // pred_check
      _
    $region7: #{tpu_custom_call.1} parent=1 // pred_check_branch
      %22 = sbr.rel (0) target = $region9
    $region8: #{tpu_custom_call.1} parent=1 // pred_region
      %24 = vsyncadd [#allocation6], 0
      %s26 = sshll.u32 %s1, 4
      %s27 = int_to_ptr.hbm [resolvable:$true] %s26
      %s28 = sshll.u32 [#allocation5], 4
      %s29 = int_to_ptr.vmem [resolvable:$true] %s28
      %31 = dma.hbm_to_vmem [thread:$0]  %s27, 16, %s29, [#allocation6]
    $region9: #{tpu_custom_call.1} parent=1 // pred_fallthru
      _
    // Predicated region
    $region10: #{tpu_custom_call.1} parent=1 // pred_check
      _
    $region11: #{tpu_custom_call.1} parent=1 // pred_check_branch
      %33 = sbr.rel (0) target = $region13
    $region12: #{tpu_custom_call.1} parent=1 // pred_region
      %35 = dma.done [#allocation3], 16
    $region13: #{tpu_custom_call.1} parent=1 // pred_fallthru
      _
    // Predicated region
    $region14: #{tpu_custom_call.1} parent=1 // pred_check
      _
    $region15: #{tpu_custom_call.1} parent=1 // pred_check_branch
      %37 = sbr.rel (0) target = $region17
    $region16: #{tpu_custom_call.1} parent=1 // pred_region
      %39 = dma.done [#allocation6], 16
    $region17: #{tpu_custom_call.1} parent=1 // pred_fallthru
      _
    %v40 = vld [vmem:[#allocation2] sm:$0x1]
    %v41 = vld [vmem:[#allocation5] sm:$0x1]
    %v42 = vmul.f32 %v40, %v41
    %vm43 = vcmask 253952
    %v44 = vsel %vm43, %v42, 0.0
    %45 = vadd.xlane.f32.xlu0 %v44
    %v46 = vpop.xlane.xlu0 %45
    %v47 = vrot.slane %v46, 4
    %v48 = vadd.f32 %v46, %v47
    %v49 = vrot.slane %v48, 2
    %v50 = vadd.f32 %v48, %v49
    %v51 = vrot.slane %v50, 1
    %v52 = vadd.f32 %v50, %v51
    %s53 = vtos %v52
    %v54 = vmul.f32 %v40, %v40
    %v55 = vsel %vm43, %v54, 0.0
    %56 = vadd.xlane.f32.xlu0 %v55
    %v57 = vpop.xlane.xlu0 %56
    %v58 = vrot.slane %v57, 4
    %v59 = vadd.f32 %v57, %v58
    %v60 = vrot.slane %v59, 2
    %v61 = vadd.f32 %v59, %v60
    %v62 = vrot.slane %v61, 1
    %v63 = vadd.f32 %v61, %v62
    %s64 = vtos %v63
    %v65 = vstv %s64
    %v66 = vrsqrt.pop %v65
    %v67 = vmul.f32 %v66, %v65
    %v68 = vmul.f32 %v67, %v66
    %v69 = vmul.f32 0.5, %v68
    %v70 = vsub.f32 1.5, %v69
    %v71 = vmul.f32 %v66, %v70
    %v72 = vmul.f32 %v65, %v71
    %vm73 = vcmp.eq.f32.partialorder %v65, inf
    %v74 = vsel %vm73, %v65, %v72
    %vm75 = vcmp.eq.f32.partialorder %v65, 0.0
    %v76 = vand.u32 %v65, 2147483648
    %v77 = vsel %vm75, %v76, %v74
    %s78 = vtos %v77
    %v79 = vmul.f32 %v41, %v41
    %v80 = vsel %vm43, %v79, 0.0
    %81 = vadd.xlane.f32.xlu0 %v80
    %v82 = vpop.xlane.xlu0 %81
    %v83 = vrot.slane %v82, 4
    %v84 = vadd.f32 %v82, %v83
    %v85 = vrot.slane %v84, 2
    %v86 = vadd.f32 %v84, %v85
    %v87 = vrot.slane %v86, 1
    %v88 = vadd.f32 %v86, %v87
    %s89 = vtos %v88
    %v90 = vstv %s89
    %v91 = vrsqrt.pop %v90
    %v92 = vmul.f32 %v91, %v90
    %v93 = vmul.f32 %v92, %v91
    %v94 = vmul.f32 0.5, %v93
    %v95 = vsub.f32 1.5, %v94
    %v96 = vmul.f32 %v91, %v95
    %v97 = vmul.f32 %v90, %v96
    %vm98 = vcmp.eq.f32.partialorder %v90, inf
    %v99 = vsel %vm98, %v90, %v97
    %vm100 = vcmp.eq.f32.partialorder %v90, 0.0
    %v101 = vand.u32 %v90, 2147483648
    %v102 = vsel %vm100, %v101, %v99
    %s103 = vtos %v102
    %s104 = smul.f32 %s78, %s103
    %s105 = smax.f32 %s104, 1e-08
    %v106 = vstv %s105
    %v107 = vrcp.pop %v106
    %v108 = vmul.f32 %v106, %v107
    %v109 = vsub.f32 1.0, %v108
    %v110 = vmul.f32 %v107, %v109
    %v111 = vadd.f32 %v107, %v110
    %vm112 = vweird.f32 %v106
    %vm113 = vweird.f32 %v107
    %vm114 = vmor %vm112, %vm113
    %v115 = vsel %vm114, %v107, %v111
    %v116 = vand.u32 2147483647, %v106
    %vm117 = vcmp.eq.f32.partialorder %v116, 8.507059e+37
    %v118 = vand.u32 %v106, 2147483648
    %v119 = vor.u32 1.1754944e-38, %v118
    %v120 = vsel %vm117, %v119, %v115
    %s121 = vtos %v120
    %s122 = smul.f32 %s53, %s121
    %s123 = smul.f32 %s122, 2.0
    %s124 = ssub.f32 %s123, %s123
    %s125 = scalar_lea.smem [#allocation7], 0
    %126 = sst [smem:[%s125]] %s124
    // Predicated region
    $region18: #{tpu_custom_call.1} parent=1 // pred_check
      _
    $region19: #{tpu_custom_call.1} parent=1 // pred_check_branch
      %128 = sbr.rel (0) target = $region21
    $region20: #{tpu_custom_call.1} parent=1 // pred_region
      %130 = vsyncadd [#allocation4], 0
      %s132 = sshll.u32 %s2, 4
      %s133 = int_to_ptr.hbm [resolvable:$true] %s132
      %135 = dma.smem_to_hbm [#allocation7], 16, %s133, [#allocation4]
    $region21: #{tpu_custom_call.1} parent=1 // pred_fallthru
      _
    // Predicated region
    $region22: #{tpu_custom_call.1} parent=1 // pred_check
      _
    $region23: #{tpu_custom_call.1} parent=1 // pred_check_branch
      %137 = sbr.rel (0) target = $region25
    $region24: #{tpu_custom_call.1} parent=1 // pred_region
      %139 = dma.done [#allocation4], 16
    $region25: #{tpu_custom_call.1} parent=1 // pred_fallthru
      _
    %140 = sfence
    %141 = vsyncpa [#allocation3], 1
    %142 = vsyncpa [#allocation6], 1
    %143 = vsyncpa [#allocation4], 1

</llo_original>
